<compile_context>
chip_gen: v6e
topology: v6e:2x2x1
jax: 0.10.0
libtpu: 0.0.40
codegen_flags: <defaults>
</compile_context>

<pallas_src>
import functools
import math

import numpy as np
import jax
import jax.numpy as jnp
from jax.experimental import pallas as pl
from jax.experimental.pallas import tpu as pltpu

N_TERMS = 10
_TWO_PI = 2.0 * math.pi
# Fourier weights for harmonic k = 1..N_TERMS: (-1)^k / (pi*k)  (trace-time constants)
_FOURIER_W = tuple(((-1.0) ** k) / (math.pi * k) for k in range(1, N_TERMS + 1))

_LANE = 512                      # lane-dense last dim (multiple of 128)
_FUSED_MAX_ELEMS = 512 * 1024    # <= 2 MiB of f32 -> single fused VMEM kernel
_VMEM_LIMIT = 48 * 1024 * 1024   # safe on v5e/v6e (128 MiB phys) and v7x (64 MiB phys)


# --------------------------- shared in-kernel math ---------------------------

def _fourier_round(t):
    """t + sum_{k=1..N_TERMS} (-1)^k/(pi*k) * sin(2*pi*k*t).

    sin(2*pi*k*t) depends only on frac(t): evaluate ONE sin + ONE cos, then
    generate the remaining harmonics with the sin-only Chebyshev recurrence
    s_{k+1} = 2*cos(theta)*s_k - s_{k-1}  (2 mul + 1 sub + 1 add per harmonic).
    """
    f = t - jnp.floor(t)
    theta = f * _TWO_PI
    s1 = jnp.sin(theta)
    c1 = jnp.cos(theta)
    two_c1 = c1 + c1
    s2 = two_c1 * s1                                   # sin(2*theta)
    z = _FOURIER_W[0] * s1 + _FOURIER_W[1] * s2
    sk_prev, sk = s1, s2
    for k in range(2, N_TERMS):
        sk, sk_prev = two_c1 * sk - sk_prev, sk
        z = z + _FOURIER_W[k] * sk
    return t + z


# ----------------------------- Pallas kernels --------------------------------

def _fused_quantize_kernel(x_ref, o_ref):
    """Whole-tensor quantization entirely in VMEM (small-tensor fast path)."""
    x = x_ref[...].astype(jnp.float32)
    src_min = jnp.min(x)
    src_max = jnp.max(x)
    src_range = src_max - src_min
    denom = jnp.where(src_range > 0.0, src_range, 1.0)   # guard constant input
    t = jnp.clip((x - src_min) * (255.0 / denom), 0.0, 255.0)
    t = _fourier_round(t)
    t_min = jnp.min(t)
    t_max = jnp.max(t)
    denom_t = t_max - t_min
    denom_t = jnp.where(denom_t > 0.0, denom_t, 1.0)      # guard constant t
    k = src_range / denom_t
    o_ref[...] = ((t - t_min) * k + src_min).astype(o_ref.dtype)


def _minmax_kernel(x_ref, min_ref, max_ref):
    """Per-block min/max of x, broadcast into (8,128) partial tiles."""
    x = x_ref[...].astype(jnp.float32)
    min_ref[...] = jnp.full(min_ref.shape, jnp.min(x), dtype=min_ref.dtype)
    max_ref[...] = jnp.full(max_ref.shape, jnp.max(x), dtype=max_ref.dtype)


def _fourier_kernel(mm_ref, x_ref, t_ref, tmin_ref, tmax_ref):
    """Transform to [0,255], clamp, Fourier rounding; emit per-block min/max of t.

    mm_ref : SMEM (2,) f32  -- [src_min, src_max] (global)
    x_ref  : VMEM (BR, LANE) native dtype
    t_ref  : VMEM (BR, LANE) f32
    tmin_ref / tmax_ref : VMEM (8, 128) f32 partial tiles
    """
    src_min = mm_ref[0]
    src_range = mm_ref[1] - src_min
    denom = jnp.where(src_range > 0.0, src_range, 1.0)    # guard constant input
    scale = 255.0 / denom                                 # one scalar divide per block

    x = x_ref[...].astype(jnp.float32)
    t = jnp.clip((x - src_min) * scale, 0.0, 255.0)
    t = _fourier_round(t)

    t_ref[...] = t
    tmin_ref[...] = jnp.full(tmin_ref.shape, jnp.min(t), dtype=tmin_ref.dtype)
    tmax_ref[...] = jnp.full(tmax_ref.shape, jnp.max(t), dtype=tmax_ref.dtype)


def _renorm_kernel(stats_ref, t_ref, o_ref):
    """Renormalize t back to the original source range; store in output dtype.

    stats_ref : SMEM (4,) f32 -- [src_min, src_max, t_min, t_max] (global)
    """
    src_min = stats_ref[0]
    src_max = stats_ref[1]
    t_min = stats_ref[2]
    t_max = stats_ref[3]
    denom_t = t_max - t_min
    denom_t = jnp.where(denom_t > 0.0, denom_t, 1.0)      # guard constant t
    k = (src_max - src_min) / denom_t                     # one scalar divide per block
    o_ref[...] = ((t_ref[...] - t_min) * k + src_min).astype(o_ref.dtype)


# --------------------------------- wrapper -----------------------------------

def _ceil_div(a, b):
    return -(-a // b)


def _quantize_impl(x, force_tiled=False, block_rows_mem=None, block_rows_cmp=None):
    orig_shape = x.shape
    orig_dtype = x.dtype
    total = int(np.prod(orig_shape))
    itemsize = int(np.dtype(orig_dtype).itemsize)

    # ---------------- fused fast path: whole tensor resident in VMEM ---------
    if not force_tiled and total <= _FUSED_MAX_ELEMS:
        if total % 128 == 0:
            xk = x.reshape(total // 128, 128)     # lane-dense, bitcast-able reshape
        else:
            xk = x.reshape(1, total)
        out = pl.pallas_call(
            _fused_quantize_kernel,
            out_shape=jax.ShapeDtypeStruct(xk.shape, orig_dtype),
            compiler_params=pltpu.CompilerParams(vmem_limit_bytes=_VMEM_LIMIT),
            cost_estimate=pl.CostEstimate(flops=55 * total,
                                          transcendentals=2 * total,
                                          bytes_accessed=2 * total * itemsize),
        )(xk)
        return out.reshape(orig_shape)

    # ---------------- tiled 3-pass path (large tensors) ----------------------
    flat = x.reshape(-1)
    rows = _ceil_div(total, _LANE)

    if block_rows_mem is None or block_rows_cmp is None:
        if rows >= 4096:
            br_mem, br_cmp = 2048, 512      # 4 MiB mem-bound blocks, 1 MiB compute blocks
        elif rows >= 1024:
            br_mem, br_cmp = 1024, 512
        else:
            br = max(8, _ceil_div(rows, 8) * 8)
            br_mem = br_cmp = br
    else:
        br_mem, br_cmp = block_rows_mem, block_rows_cmp
    assert br_cmp % 8 == 0 and br_mem % br_cmp == 0

    padded_rows = _ceil_div(rows, br_mem) * br_mem
    padded_total = padded_rows * _LANE
    nb_mem = padded_rows // br_mem
    nb_cmp = padded_rows // br_cmp

    if padded_total != total:
        # Pad with an existing data value (flat[0]) so global min/max are
        # unaffected.  Do NOT replace with a constant (e.g. 0.0).
        pad = jnp.full((padded_total - total,), flat[0], orig_dtype)
        flat = jnp.concatenate([flat, pad])
    x2d = flat.reshape(padded_rows, _LANE)

    mem_spec = pl.BlockSpec((br_mem, _LANE), lambda i: (i, 0))
    cmp_spec = pl.BlockSpec((br_cmp, _LANE), lambda i: (i, 0))
    part_spec = pl.BlockSpec((8, 128), lambda i: (i, 0))
    smem_spec = pl.BlockSpec(memory_space=pltpu.MemorySpace.SMEM)

    params_mem = pltpu.CompilerParams(dimension_semantics=("parallel",),
                                      vmem_limit_bytes=_VMEM_LIMIT)
    params_cmp = pltpu.CompilerParams(dimension_semantics=("parallel",),
                                      vmem_limit_bytes=_VMEM_LIMIT)

    # ---- pass A: global min / max of x (mem-bound, large blocks) -----------
    xmin_p, xmax_p = pl.pallas_call(
        _minmax_kernel,
        grid=(nb_mem,),
        in_specs=[mem_spec],
        out_specs=(part_spec, part_spec),
        out_shape=(jax.ShapeDtypeStruct((nb_mem * 8, 128), jnp.float32),
                   jax.ShapeDtypeStruct((nb_mem * 8, 128), jnp.float32)),
        compiler_params=params_mem,
    )(x2d)
    src_min = jnp.min(xmin_p)
    src_max = jnp.max(xmax_p)
    mm = jnp.stack([src_min, src_max])

    # ---- pass B: transform + Fourier rounding (compute-bound) --------------
    cost_b = pl.CostEstimate(flops=50 * padded_total,
                             transcendentals=2 * padded_total,
                             bytes_accessed=padded_total * (itemsize + 4))
    t2d, tmin_p, tmax_p = pl.pallas_call(
        _fourier_kernel,
        grid=(nb_cmp,),
        in_specs=[smem_spec, cmp_spec],
        out_specs=(cmp_spec, part_spec, part_spec),
        out_shape=(jax.ShapeDtypeStruct((padded_rows, _LANE), jnp.float32),
                   jax.ShapeDtypeStruct((nb_cmp * 8, 128), jnp.float32),
                   jax.ShapeDtypeStruct((nb_cmp * 8, 128), jnp.float32)),
        compiler_params=params_cmp,
        cost_estimate=cost_b,
    )(mm, x2d)
    t_min = jnp.min(tmin_p)
    t_max = jnp.max(tmax_p)
    stats = jnp.stack([src_min, src_max, t_min, t_max])

    # ---- pass C: renormalize back to the original range (mem-bound) --------
    out2d = pl.pallas_call(
        _renorm_kernel,
        grid=(nb_mem,),
        in_specs=[smem_spec, mem_spec],
        out_specs=mem_spec,
        out_shape=jax.ShapeDtypeStruct((padded_rows, _LANE), orig_dtype),
        compiler_params=params_mem,
    )(stats, t2d)

    out = out2d.reshape(-1)
    if padded_total != total:
        out = out[:total]
    return out.reshape(orig_shape)


_quantize = jax.jit(_quantize_impl)


# ------------------------------ noise layers ---------------------------------

class Quantization:
    """Pallas-backed HiDDeN-style Quantization noise layer."""

    def __call__(self, noised_and_cover):
        noised_and_cover = list(noised_and_cover)
        noised_and_cover[0] = _quantize(noised_and_cover[0])
        return noised_and_cover


class Identity:
    """Pass-through noise layer: a pure no-op (no kernel, no HBM copy)."""

    def __call__(self, noised_and_cover):
        return noised_and_cover


# --------------------------------- Noiser ------------------------------------

class Noiser:
    """JAX/Pallas re-implementation of the PyTorch Noiser dispatcher."""

    def __init__(self, noise_layers, if_random):
        self.noise_layers = []
        for layer in noise_layers:
            if isinstance(layer, str):
                if layer == 'QuantizationPlaceholder':
                    self.noise_layers.append(Quantization())
                elif layer == 'JpegPlaceholder':
                    # TODO(synk): DCT-based JpegCompression not implemented.
                    raise NotImplementedError('JpegPlaceholder not implemented')
                else:
                    raise ValueError(
                        f'Wrong layer placeholder string in Noiser.__init__(): {layer}')
            else:
                self.noise_layers.append(layer)
        self.if_random = if_random

    def __call__(self, encoded_and_cover):
        if self.if_random:
            noise_layer = np.random.choice(self.noise_layers, 1)[0]
        else:
            # Mirrors upstream: only meaningful if noise_layers is itself callable.
            noise_layer = self.noise_layers
        return noise_layer(encoded_and_cover)


# -------------------------------- reference ----------------------------------

def _quantization_ref(x):
    """Pure-numpy (float64) reference of the Quantization forward."""
    x = np.asarray(x, dtype=np.float64)
    w = np.array([((-1.0) ** (n + 1)) / (np.pi * (n + 1)) for n in range(N_TERMS)])
    s = np.array([2.0 * np.pi * (n + 1) for n in range(N_TERMS)])
    src_min, src_max = x.min(), x.max()
    t = (x - src_min) / (src_max - src_min) * 255.0
    t = np.clip(t, 0.0, 255.0)
    t = t + np.sum(w * np.sin(t[..., None] * s), axis=-1)
    t = (t - t.min()) / (t.max() - t.min())
    return (t * (src_max - src_min) + src_min).astype(np.float32)


if __name__ == "__main__":
    np.random.seed(0)
    key = jax.random.PRNGKey(0)
    k_enc, k_cov, k_odd, k_big = jax.random.split(key, 4)

    # Small NCHW inputs consistent with an image watermarking pipeline.
    encoded = jax.random.uniform(k_enc, (2, 4, 16, 16), dtype=jnp.float32,
                                 minval=-1.0, maxval=1.0)
    cover = jax.random.uniform(k_cov, (2, 4, 16, 16), dtype=jnp.float32,
                               minval=-1.0, maxval=1.0)

    # Quantization path through the Noiser dispatcher (single layer -> deterministic).
    noiser = Noiser(['QuantizationPlaceholder'], if_random=True)
    out_encoded, out_cover = noiser([encoded, cover])
    out_encoded = jax.block_until_ready(out_encoded)

    ref = _quantization_ref(np.asarray(encoded))
    np.testing.assert_allclose(np.asarray(out_encoded), ref, rtol=1e-4, atol=1e-4)
    assert out_encoded.shape == encoded.shape
    np.testing.assert_array_equal(np.asarray(out_cover), np.asarray(cover))

    # Identity path is a pure no-op.
    id_out = Identity()([encoded, cover])
    assert id_out[0] is encoded and id_out[1] is cover

    # Odd-sized input exercises the fused path's non-lane-aligned branch.
    odd = jax.random.uniform(k_odd, (1, 3, 20, 20), dtype=jnp.float32,
                             minval=-2.0, maxval=3.0)
    odd_out = jax.block_until_ready(_quantize(odd))
    np.testing.assert_allclose(np.asarray(odd_out),
                               _quantization_ref(np.asarray(odd)),
                               rtol=1e-4, atol=1e-4)

    # Forced tiled multi-pass path with tiny blocks (multi-block grid at test size).
    _quantize_tiled = jax.jit(functools.partial(
        _quantize_impl, force_tiled=True, block_rows_mem=32, block_rows_cmp=16))
    big = jax.random.uniform(k_big, (2, 4, 32, 128), dtype=jnp.float32,
                             minval=-1.5, maxval=2.5)
    big_out = jax.block_until_ready(_quantize_tiled(big))
    np.testing.assert_allclose(np.asarray(big_out),
                               _quantization_ref(np.asarray(big)),
                               rtol=1e-4, atol=1e-4)

    # Forced tiled path with padding (total not a multiple of LANE*block).
    _quantize_tiled_pad = jax.jit(functools.partial(
        _quantize_impl, force_tiled=True, block_rows_mem=8, block_rows_cmp=8))
    pad_out = jax.block_until_ready(_quantize_tiled_pad(odd))
    np.testing.assert_allclose(np.asarray(pad_out),
                               _quantization_ref(np.asarray(odd)),
                               rtol=1e-4, atol=1e-4)

    print("KERNEL_OK")
</pallas_src>

<mosaic_0001>
module attributes {stable_mosaic.version = 11 : i64} {
  func.func @_fused_quantize_kernel(%arg0: memref<16x128xf32, #tpu.memory_space<vmem>>, %arg1: memref<16x128xf32, #tpu.memory_space<vmem>>) attributes {dimension_semantics = [], scalar_prefetch = 0 : i64, scratch_operands = 0 : i64, tpu.core_type = #tpu.core_type<tc>} {
    %c0 = arith.constant 0 : index
    %c0_0 = arith.constant 0 : index
    %0 = vector.load %arg0[%c0, %c0_0] : memref<16x128xf32, #tpu.memory_space<vmem>>, vector<16x128xf32>
    %1 = vector.shape_cast %0 : vector<16x128xf32> to vector<1x16x128xf32>
    %cst = arith.constant dense<0x7F800000> : vector<1xf32>
    %2 = vector.multi_reduction <minimumf>, %1, %cst [1, 2] : vector<1x16x128xf32> to vector<1xf32>
    %3 = vector.shape_cast %2 : vector<1xf32> to vector<1x1x1xf32>
    %4 = vector.extract %3[0, 0, 0] : f32 from vector<1x1x1xf32>
    %5 = vector.shape_cast %0 : vector<16x128xf32> to vector<1x16x128xf32>
    %cst_1 = arith.constant dense<0xFF800000> : vector<1xf32>
    %6 = vector.multi_reduction <maximumf>, %5, %cst_1 [1, 2] : vector<1x16x128xf32> to vector<1xf32>
    %7 = vector.shape_cast %6 : vector<1xf32> to vector<1x1x1xf32>
    %8 = vector.extract %7[0, 0, 0] : f32 from vector<1x1x1xf32>
    %9 = arith.subf %8, %4 : f32
    %cst_2 = arith.constant 0.000000e+00 : f32
    %10 = arith.cmpf ogt, %9, %cst_2 : f32
    %cst_3 = arith.constant 1.000000e+00 : f32
    %11 = arith.select %10, %9, %cst_3 : f32
    %12 = vector.broadcast %4 : f32 to vector<16x128xf32>
    %13 = arith.subf %0, %12 : vector<16x128xf32>
    %cst_4 = arith.constant 2.550000e+02 : f32
    %14 = arith.divf %cst_4, %11 : f32
    %15 = vector.broadcast %14 : f32 to vector<16x128xf32>
    %16 = arith.mulf %13, %15 : vector<16x128xf32>
    %cst_5 = arith.constant 0.000000e+00 : f32
    %cst_6 = arith.constant 2.550000e+02 : f32
    %17 = vector.broadcast %cst_5 : f32 to vector<16x128xf32>
    %18 = arith.maximumf %17, %16 : vector<16x128xf32>
    %19 = vector.broadcast %cst_6 : f32 to vector<16x128xf32>
    %20 = arith.minimumf %19, %18 : vector<16x128xf32>
    %21 = math.floor %20 : vector<16x128xf32>
    %22 = arith.subf %20, %21 : vector<16x128xf32>
    %cst_7 = arith.constant 6.28318548 : f32
    %23 = vector.broadcast %cst_7 : f32 to vector<16x128xf32>
    %24 = arith.mulf %22, %23 : vector<16x128xf32>
    %25 = math.sin %24 : vector<16x128xf32>
    %26 = math.cos %24 : vector<16x128xf32>
    %27 = arith.addf %26, %26 : vector<16x128xf32>
    %28 = arith.mulf %27, %25 : vector<16x128xf32>
    %cst_8 = arith.constant -0.318309873 : f32
    %29 = vector.broadcast %cst_8 : f32 to vector<16x128xf32>
    %30 = arith.mulf %29, %25 : vector<16x128xf32>
    %cst_9 = arith.constant 0.159154937 : f32
    %31 = vector.broadcast %cst_9 : f32 to vector<16x128xf32>
    %32 = arith.mulf %31, %28 : vector<16x128xf32>
    %33 = arith.addf %30, %32 : vector<16x128xf32>
    %34 = arith.mulf %27, %28 : vector<16x128xf32>
    %35 = arith.subf %34, %25 : vector<16x128xf32>
    %cst_10 = arith.constant -0.106103294 : f32
    %36 = vector.broadcast %cst_10 : f32 to vector<16x128xf32>
    %37 = arith.mulf %36, %35 : vector<16x128xf32>
    %38 = arith.addf %33, %37 : vector<16x128xf32>
    %39 = arith.mulf %27, %35 : vector<16x128xf32>
    %40 = arith.subf %39, %28 : vector<16x128xf32>
    %cst_11 = arith.constant 0.0795774683 : f32
    %41 = vector.broadcast %cst_11 : f32 to vector<16x128xf32>
    %42 = arith.mulf %41, %40 : vector<16x128xf32>
    %43 = arith.addf %38, %42 : vector<16x128xf32>
    %44 = arith.mulf %27, %40 : vector<16x128xf32>
    %45 = arith.subf %44, %35 : vector<16x128xf32>
    %cst_12 = arith.constant -0.0636619776 : f32
    %46 = vector.broadcast %cst_12 : f32 to vector<16x128xf32>
    %47 = arith.mulf %46, %45 : vector<16x128xf32>
    %48 = arith.addf %43, %47 : vector<16x128xf32>
    %49 = arith.mulf %27, %45 : vector<16x128xf32>
    %50 = arith.subf %49, %40 : vector<16x128xf32>
    %cst_13 = arith.constant 0.0530516468 : f32
    %51 = vector.broadcast %cst_13 : f32 to vector<16x128xf32>
    %52 = arith.mulf %51, %50 : vector<16x128xf32>
    %53 = arith.addf %48, %52 : vector<16x128xf32>
    %54 = arith.mulf %27, %50 : vector<16x128xf32>
    %55 = arith.subf %54, %45 : vector<16x128xf32>
    %cst_14 = arith.constant -0.0454728417 : f32
    %56 = vector.broadcast %cst_14 : f32 to vector<16x128xf32>
    %57 = arith.mulf %56, %55 : vector<16x128xf32>
    %58 = arith.addf %53, %57 : vector<16x128xf32>
    %59 = arith.mulf %27, %55 : vector<16x128xf32>
    %60 = arith.subf %59, %50 : vector<16x128xf32>
    %cst_15 = arith.constant 0.0397887342 : f32
    %61 = vector.broadcast %cst_15 : f32 to vector<16x128xf32>
    %62 = arith.mulf %61, %60 : vector<16x128xf32>
    %63 = arith.addf %58, %62 : vector<16x128xf32>
    %64 = arith.mulf %27, %60 : vector<16x128xf32>
    %65 = arith.subf %64, %55 : vector<16x128xf32>
    %cst_16 = arith.constant -0.0353677645 : f32
    %66 = vector.broadcast %cst_16 : f32 to vector<16x128xf32>
    %67 = arith.mulf %66, %65 : vector<16x128xf32>
    %68 = arith.addf %63, %67 : vector<16x128xf32>
    %69 = arith.mulf %27, %65 : vector<16x128xf32>
    %70 = arith.subf %69, %60 : vector<16x128xf32>
    %cst_17 = arith.constant 0.0318309888 : f32
    %71 = vector.broadcast %cst_17 : f32 to vector<16x128xf32>
    %72 = arith.mulf %71, %70 : vector<16x128xf32>
    %73 = arith.addf %68, %72 : vector<16x128xf32>
    %74 = arith.addf %20, %73 : vector<16x128xf32>
    %75 = vector.shape_cast %74 : vector<16x128xf32> to vector<1x16x128xf32>
    %cst_18 = arith.constant dense<0x7F800000> : vector<1xf32>
    %76 = vector.multi_reduction <minimumf>, %75, %cst_18 [1, 2] : vector<1x16x128xf32> to vector<1xf32>
    %77 = vector.shape_cast %76 : vector<1xf32> to vector<1x1x1xf32>
    %78 = vector.extract %77[0, 0, 0] : f32 from vector<1x1x1xf32>
    %79 = vector.shape_cast %74 : vector<16x128xf32> to vector<1x16x128xf32>
    %cst_19 = arith.constant dense<0xFF800000> : vector<1xf32>
    %80 = vector.multi_reduction <maximumf>, %79, %cst_19 [1, 2] : vector<1x16x128xf32> to vector<1xf32>
    %81 = vector.shape_cast %80 : vector<1xf32> to vector<1x1x1xf32>
    %82 = vector.extract %81[0, 0, 0] : f32 from vector<1x1x1xf32>
    %83 = arith.subf %82, %78 : f32
    %cst_20 = arith.constant 0.000000e+00 : f32
    %84 = arith.cmpf ogt, %83, %cst_20 : f32
    %cst_21 = arith.constant 1.000000e+00 : f32
    %85 = arith.select %84, %83, %cst_21 : f32
    %86 = arith.divf %9, %85 : f32
    %87 = vector.broadcast %78 : f32 to vector<16x128xf32>
    %88 = arith.subf %74, %87 : vector<16x128xf32>
    %89 = vector.broadcast %86 : f32 to vector<16x128xf32>
    %90 = arith.mulf %88, %89 : vector<16x128xf32>
    %91 = vector.broadcast %4 : f32 to vector<16x128xf32>
    %92 = arith.addf %90, %91 : vector<16x128xf32>
    %c0_22 = arith.constant 0 : index
    %c0_23 = arith.constant 0 : index
    %93 = vector.load %arg1[%c0_22, %c0_23] : memref<16x128xf32, #tpu.memory_space<vmem>>, vector<16x128xf32>
    tpu.vector_store %arg1[%c0_22, %c0_23], %92 {strides = array<i32>} : memref<16x128xf32, #tpu.memory_space<vmem>>, vector<16x128xf32>,
    return
  }
}

</mosaic_0001>

<llo_original>
// kernel: _quantize_impl.1
$region0: #{_quantize_impl.1}
  #allocation0 [shape = 'u32[]', space=smem, size = 0x4, offset = 0x4, fixed_abs, tag = 'smem constant byte address 0x4 - core index']
  #allocation1 [shape = 'u32[144,128]{1,0:T(1,128)}', space=vmem, size = 0x12000, scoped, tag = 'internal scratch']
  %s0 = inlined_call_operand.vmem [shape: f32[16,128], index: 0, kind: input, shape index: {}]
  %s1 = inlined_call_operand.vmem [shape: f32[16,128], index: 1, kind: output, shape index: {}]
  %s2 = sld [smem:[#allocation0]]
  $region14: #{_quantize_impl.1} parent=0
    _
  %s4 = ssub.s32 1, %s2
  %s5 = scalar_select 0, %s4, %s2
  // Predicated region
  $region2: #{_quantize_impl.1} parent=0 // pred_check
    _
  $region3: #{_quantize_impl.1} parent=0 // pred_check_branch
    %7 = sbr.rel (0) target = $region5
  $region4: #{_quantize_impl.1} parent=0 // pred_region
    _
  $region5: #{_quantize_impl.1} parent=0 // pred_fallthru
    _
  %v8 = vld [vmem:[%s0] sm:$0xff]
  %v9 = vld [vmem:[%s0 + $0x8] sm:$0xff]
  %v10 = vmin.f32 %v8, %v9
  %11 = vmin.xlane.f32.xlu0 %v10
  %v12 = vpop.xlane.xlu0 %11
  %v13 = vrot.slane %v12, 4
  %v14 = vmin.f32 %v12, %v13
  %v15 = vrot.slane %v14, 2
  %v16 = vmin.f32 %v14, %v15
  %v17 = vrot.slane %v16, 1
  %v18 = vmin.f32 %v16, %v17
  %s19 = vtos %v18
  %v20 = vmax.f32 %v8, %v9
  %21 = vmax.xlane.f32.xlu0 %v20
  %v22 = vpop.xlane.xlu0 %21
  %v23 = vrot.slane %v22, 4
  %v24 = vmax.f32 %v22, %v23
  %v25 = vrot.slane %v24, 2
  %v26 = vmax.f32 %v24, %v25
  %v27 = vrot.slane %v26, 1
  %v28 = vmax.f32 %v26, %v27
  %s29 = vtos %v28
  %s30 = ssub.f32 %s29, %s19
  %p31 = scmp.gt.f32.partialorder %s30, 0.0
  %s32 = scalar_select %p31, %s30, 1.0
  %v33 = vstv %s19
  %v34 = vsub.f32 %v8, %v33
  %v35 = vsub.f32 %v9, %v33
  %v36 = vstv %s32
  %v37 = vrcp.pop %v36
  %s38 = vtos %v37
  %s39 = smul.f32 255.0, %s38
  %v40 = vstv %s39
  %v41 = vmul.f32 %v34, %v40
  %v42 = vmul.f32 %v35, %v40
  %v43 = vmax.f32 %v41, 0.0
  %v44 = vmax.f32 %v42, 0.0
  %v45 = vmin.f32 %v43, 255.0
  %v46 = vmin.f32 %v44, 255.0
  %v47 = vfloor.f32 %v45
  %v48 = vfloor.f32 %v46
  %v49 = vsub.f32 %v45, %v47
  %v50 = vsub.f32 %v46, %v48
  %v51 = vmul.f32 %v49, 6.2831855
  %v52 = vmul.f32 %v50, 6.2831855
  %v53 = vand.u32 2147483647, %v51
  %vm54 = vcmp.le.f32.partialorder %v53, 0.7853982
  %vm55 = vcmp.lt.s32.totalorder %v51, 0
  %v56 = vand.u32 %v51, 2139095040
  %v57 = vshrl.u32 %v56, 23
  %v58 = vsub.s32 %v57, 127
  %v59 = vand.u32 2147483647, %v51
  %v60 = vand.u32 %v59, 8388607
  %v61 = vor.u32 %v60, 8388608
  %v62 = vsub.s32 0, %v61
  %v63 = vadd.s32 %v58, 1
  %vm64 = vcmp.gt.s32.totalorder %v63, 0
  %v65 = vsel %vm64, %v63, 0
  %v66 = vshrl.u32 %v65, 5
  %v67 = vand.u32 %v65, 31
  %v68 = vsub.s32 32, %v67
  %v69 = vshrl.u32 683565275, %v68
  %v70 = vshll.u32 683565275, %v67
  %v71 = vshrl.u32 2475754826, %v68
  %v72 = vor.u32 %v70, %v71
  %v73 = vshll.u32 2475754826, %v67
  %v74 = vshrl.u32 2131351028, %v68
  %v75 = vor.u32 %v73, %v74
  %v76 = vshll.u32 2131351028, %v67
  %v77 = vshrl.u32 2102212464, %v68
  %v78 = vor.u32 %v76, %v77
  %v79 = vshll.u32 2102212464, %v67
  %v80 = vshrl.u32 920167782, %v68
  %v81 = vor.u32 %v79, %v80
  %v82 = vshll.u32 920167782, %v67
  %v83 = vshrl.u32 1326507024, %v68
  %v84 = vor.u32 %v82, %v83
  %vm85 = vcmp.lt.s32.totalorder %v66, 1
  %vm86 = vcmp.lt.s32.totalorder %v66, 2
  %vm87 = vcmp.lt.s32.totalorder %v66, 3
  %vm88 = vcmp.lt.s32.totalorder %v66, 4
  %v89 = vsel %vm85, %v69, %v72
  %v90 = vsel %vm88, %v78, 2102212464
  %v91 = vsel %vm87, %v75, %v90
  %v92 = vsel %vm86, %v89, %v91
  %v93 = vsel %vm85, %v72, %v75
  %v94 = vsel %vm88, %v81, 920167782
  %v95 = vsel %vm87, %v78, %v94
  %v96 = vsel %vm86, %v93, %v95
  %v97 = vsel %vm85, %v75, %v78
  %v98 = vsel %vm88, %v84, 1326507024
  %v99 = vsel %vm87, %v81, %v98
  %v100 = vsel %vm86, %v97, %v99
  %v101 = vshll.u32 %v61, 8
  %v102 = vmul.u32.u64.compose %v101, %v100
  %v103 = vextract.low.u32 %v102
  %v104 = vextract.high.u32 %v102
  %v105 = vmul.u32.u64.compose %v101, %v96
  %v106 = vextract.low.u32 %v105
  %v107 = vextract.high.u32 %v105
  %v108 = vmul.u32 %v101, %v92
  %v109 = vadd.s32 %v104, %v106
  %vm110 = vc.u32 %v104, %v106
  %v111 = vadd.s32 %v107, 1
  %v112 = vsel %vm110, %v111, %v107
  %v113 = vadd.s32 %v108, %v112
  %v114 = vadd.s32 %v113, 536870912
  %v115 = vshrl.u32 %v114, 30
  %v116 = vshll.u32 %v115, 30
  %v117 = vsub.s32 %v113, %v116
  %vm118 = vcmp.lt.s32.totalorder %v117, 0
  %v119 = vsub.s32 0, %v117
  %v120 = vsel %vm118, %v119, %v117
  %v121 = vclz %v120
  %v122 = vsub.s32 %v121, 2
  %vm123 = vcmp.gt.s32.totalorder 0, %v122
  %v124 = vsel %vm123, 0, %v122
  %v125 = vsub.s32 32, %v124
  %v126 = vshll.u32 %v117, %v124
  %v127 = vshrl.u32 %v109, %v125
  %v128 = vor.u32 %v126, %v127
  %v129 = vsub.s32 4294967266, %v124
  %v130 = vadd.s32 %v129, 127
  %v131 = vshll.u32 %v130, 23
  %v132 = vor.u32 4788187, %v131
  %v133 = vand.u32 2147483647, %v132
  %v135 = vcvt.s32.f32 %v128
  %v136 = vmul.f32 %v135, %v133
  %v137 = vxor.u32 %v136, 2147483648
  %v138 = vsel %vm55, %v137, %v136
  %v139 = vsub.s32 4, %v115
  %v140 = vsel %vm55, %v139, %v115
  %v141 = vsel %vm54, %v51, %v138
  %v142 = vsel %vm54, 0, %v140
  %v143 = vcosq.f32.pop %v141
  %v144 = vsinq.f32.pop %v141
  %vm145 = vweird.f32 %v51
  %v146 = vadd.s32 %v142, 3
  %v147 = vand.u32 %v146, 3
  %vm148 = vcmp.lt.s32.totalorder %v147, 2
  %vm149 = vcmp.eq.s32.totalorder %v147, 0
  %v150 = vxor.u32 %v144, 2147483648
  %v151 = vsel %vm149, %v143, %v150
  %vm152 = vcmp.eq.s32.totalorder %v147, 2
  %v153 = vxor.u32 %v143, 2147483648
  %v154 = vsel %vm152, %v153, %v144
  %v155 = vsel %vm148, %v151, %v154
  %v156 = vsel %vm145, nan, %v155
  %v157 = vand.u32 2147483647, %v52
  %vm158 = vcmp.le.f32.partialorder %v157, 0.7853982
  %vm159 = vcmp.lt.s32.totalorder %v52, 0
  %v160 = vand.u32 %v52, 2139095040
  %v161 = vshrl.u32 %v160, 23
  %v162 = vsub.s32 %v161, 127
  %v163 = vand.u32 2147483647, %v52
  %v164 = vand.u32 %v163, 8388607
  %v165 = vor.u32 %v164, 8388608
  %v166 = vsub.s32 0, %v165
  %v167 = vadd.s32 %v162, 1
  %vm168 = vcmp.gt.s32.totalorder %v167, 0
  %v169 = vsel %vm168, %v167, 0
  %v170 = vshrl.u32 %v169, 5
  %v171 = vand.u32 %v169, 31
  %v172 = vsub.s32 32, %v171
  %v173 = vshrl.u32 683565275, %v172
  %v174 = vshll.u32 683565275, %v171
  %v175 = vshrl.u32 2475754826, %v172
  %v176 = vor.u32 %v174, %v175
  %v177 = vshll.u32 2475754826, %v171
  %v178 = vshrl.u32 2131351028, %v172
  %v179 = vor.u32 %v177, %v178
  %v180 = vshll.u32 2131351028, %v171
  %v181 = vshrl.u32 2102212464, %v172
  %v182 = vor.u32 %v180, %v181
  %v183 = vshll.u32 2102212464, %v171
  %v184 = vshrl.u32 920167782, %v172
  %v185 = vor.u32 %v183, %v184
  %v186 = vshll.u32 920167782, %v171
  %v187 = vshrl.u32 1326507024, %v172
  %v188 = vor.u32 %v186, %v187
  %vm189 = vcmp.lt.s32.totalorder %v170, 1
  %vm190 = vcmp.lt.s32.totalorder %v170, 2
  %vm191 = vcmp.lt.s32.totalorder %v170, 3
  %vm192 = vcmp.lt.s32.totalorder %v170, 4
  %v193 = vsel %vm189, %v173, %v176
  %v194 = vsel %vm192, %v182, 2102212464
  %v195 = vsel %vm191, %v179, %v194
  %v196 = vsel %vm190, %v193, %v195
  %v197 = vsel %vm189, %v176, %v179
  %v198 = vsel %vm192, %v185, 920167782
  %v199 = vsel %vm191, %v182, %v198
  %v200 = vsel %vm190, %v197, %v199
  %v201 = vsel %vm189, %v179, %v182
  %v202 = vsel %vm192, %v188, 1326507024
  %v203 = vsel %vm191, %v185, %v202
  %v204 = vsel %vm190, %v201, %v203
  %v205 = vshll.u32 %v165, 8
  %v206 = vmul.u32.u64.compose %v205, %v204
  %v207 = vextract.low.u32 %v206
  %v208 = vextract.high.u32 %v206
  %v209 = vmul.u32.u64.compose %v205, %v200
  %v210 = vextract.low.u32 %v209
  %v211 = vextract.high.u32 %v209
  %v212 = vmul.u32 %v205, %v196
  %v213 = vadd.s32 %v208, %v210
  %vm214 = vc.u32 %v208, %v210
  %v215 = vadd.s32 %v211, 1
  %v216 = vsel %vm214, %v215, %v211
  %v217 = vadd.s32 %v212, %v216
  %v218 = vadd.s32 %v217, 536870912
  %v219 = vshrl.u32 %v218, 30
  %v220 = vshll.u32 %v219, 30
  %v221 = vsub.s32 %v217, %v220
  %vm222 = vcmp.lt.s32.totalorder %v221, 0
  %v223 = vsub.s32 0, %v221
  %v224 = vsel %vm222, %v223, %v221
  %v225 = vclz %v224
  %v226 = vsub.s32 %v225, 2
  %vm227 = vcmp.gt.s32.totalorder 0, %v226
  %v228 = vsel %vm227, 0, %v226
  %v229 = vsub.s32 32, %v228
  %v230 = vshll.u32 %v221, %v228
  %v231 = vshrl.u32 %v213, %v229
  %v232 = vor.u32 %v230, %v231
  %v233 = vsub.s32 4294967266, %v228
  %v234 = vadd.s32 %v233, 127
  %v235 = vshll.u32 %v234, 23
  %v236 = vor.u32 4788187, %v235
  %v237 = vand.u32 2147483647, %v236
  %v239 = vcvt.s32.f32 %v232
  %v240 = vmul.f32 %v239, %v237
  %v241 = vxor.u32 %v240, 2147483648
  %v242 = vsel %vm159, %v241, %v240
  %v243 = vsub.s32 4, %v219
  %v244 = vsel %vm159, %v243, %v219
  %v245 = vsel %vm158, %v52, %v242
  %v246 = vsel %vm158, 0, %v244
  %v247 = vcosq.f32.pop %v245
  %v248 = vsinq.f32.pop %v245
  %vm249 = vweird.f32 %v52
  %v250 = vadd.s32 %v246, 3
  %v251 = vand.u32 %v250, 3
  %vm252 = vcmp.lt.s32.totalorder %v251, 2
  %vm253 = vcmp.eq.s32.totalorder %v251, 0
  %v254 = vxor.u32 %v248, 2147483648
  %v255 = vsel %vm253, %v247, %v254
  %vm256 = vcmp.eq.s32.totalorder %v251, 2
  %v257 = vxor.u32 %v247, 2147483648
  %v258 = vsel %vm256, %v257, %v248
  %v259 = vsel %vm252, %v255, %v258
  %v260 = vsel %vm249, nan, %v259
  %v261 = vand.u32 2147483647, %v51
  %vm262 = vcmp.le.f32.partialorder %v261, 0.7853982
  %vm263 = vcmp.lt.s32.totalorder %v51, 0
  %v264 = vand.u32 %v51, 2139095040
  %v265 = vshrl.u32 %v264, 23
  %v266 = vsub.s32 %v265, 127
  %v267 = vand.u32 2147483647, %v51
  %v268 = vand.u32 %v267, 8388607
  %v269 = vor.u32 %v268, 8388608
  %v270 = vsub.s32 0, %v269
  %v271 = vadd.s32 %v266, 1
  %vm272 = vcmp.gt.s32.totalorder %v271, 0
  %v273 = vsel %vm272, %v271, 0
  %v274 = vshrl.u32 %v273, 5
  %v275 = vand.u32 %v273, 31
  %v276 = vsub.s32 32, %v275
  %v277 = vshrl.u32 683565275, %v276
  %v278 = vshll.u32 683565275, %v275
  %v279 = vshrl.u32 2475754826, %v276
  %v280 = vor.u32 %v278, %v279
  %v281 = vshll.u32 2475754826, %v275
  %v282 = vshrl.u32 2131351028, %v276
  %v283 = vor.u32 %v281, %v282
  %v284 = vshll.u32 2131351028, %v275
  %v285 = vshrl.u32 2102212464, %v276
  %v286 = vor.u32 %v284, %v285
  %v287 = vshll.u32 2102212464, %v275
  %v288 = vshrl.u32 920167782, %v276
  %v289 = vor.u32 %v287, %v288
  %v290 = vshll.u32 920167782, %v275
  %v291 = vshrl.u32 1326507024, %v276
  %v292 = vor.u32 %v290, %v291
  %vm293 = vcmp.lt.s32.totalorder %v274, 1
  %vm294 = vcmp.lt.s32.totalorder %v274, 2
  %vm295 = vcmp.lt.s32.totalorder %v274, 3
  %vm296 = vcmp.lt.s32.totalorder %v274, 4
  %v297 = vsel %vm293, %v277, %v280
  %v298 = vsel %vm296, %v286, 2102212464
  %v299 = vsel %vm295, %v283, %v298
  %v300 = vsel %vm294, %v297, %v299
  %v301 = vsel %vm293, %v280, %v283
  %v302 = vsel %vm296, %v289, 920167782
  %v303 = vsel %vm295, %v286, %v302
  %v304 = vsel %vm294, %v301, %v303
  %v305 = vsel %vm293, %v283, %v286
  %v306 = vsel %vm296, %v292, 1326507024
  %v307 = vsel %vm295, %v289, %v306
  %v308 = vsel %vm294, %v305, %v307
  %v309 = vshll.u32 %v269, 8
  %v310 = vmul.u32.u64.compose %v309, %v308
  %v311 = vextract.low.u32 %v310
  %v312 = vextract.high.u32 %v310
  %v313 = vmul.u32.u64.compose %v309, %v304
  %v314 = vextract.low.u32 %v313
  %v315 = vextract.high.u32 %v313
  %v316 = vmul.u32 %v309, %v300
  %v317 = vadd.s32 %v312, %v314
  %vm318 = vc.u32 %v312, %v314
  %v319 = vadd.s32 %v315, 1
  %v320 = vsel %vm318, %v319, %v315
  %v321 = vadd.s32 %v316, %v320
  %v322 = vadd.s32 %v321, 536870912
  %v323 = vshrl.u32 %v322, 30
  %v324 = vshll.u32 %v323, 30
  %v325 = vsub.s32 %v321, %v324
  %vm326 = vcmp.lt.s32.totalorder %v325, 0
  %v327 = vsub.s32 0, %v325
  %v328 = vsel %vm326, %v327, %v325
  %v329 = vclz %v328
  %v330 = vsub.s32 %v329, 2
  %vm331 = vcmp.gt.s32.totalorder 0, %v330
  %v332 = vsel %vm331, 0, %v330
  %v333 = vsub.s32 32, %v332
  %v334 = vshll.u32 %v325, %v332
  %v335 = vshrl.u32 %v317, %v333
  %v336 = vor.u32 %v334, %v335
  %v337 = vsub.s32 4294967266, %v332
  %v338 = vadd.s32 %v337, 127
  %v339 = vshll.u32 %v338, 23
  %v340 = vor.u32 4788187, %v339
  %v341 = vand.u32 2147483647, %v340
  %v343 = vcvt.s32.f32 %v336
  %v344 = vmul.f32 %v343, %v341
  %v345 = vxor.u32 %v344, 2147483648
  %v346 = vsel %vm263, %v345, %v344
  %v347 = vsub.s32 4, %v323
  %v348 = vsel %vm263, %v347, %v323
  %v349 = vsel %vm262, %v51, %v346
  %v350 = vsel %vm262, 0, %v348
  %v351 = vcosq.f32.pop %v349
  %v352 = vsinq.f32.pop %v349
  %vm353 = vweird.f32 %v51
  %v354 = vand.u32 %v350, 3
  %vm355 = vcmp.lt.s32.totalorder %v354, 2
  %vm356 = vcmp.eq.s32.totalorder %v354, 0
  %v357 = vxor.u32 %v352, 2147483648
  %v358 = vsel %vm356, %v351, %v357
  %vm359 = vcmp.eq.s32.totalorder %v354, 2
  %v360 = vxor.u32 %v351, 2147483648
  %v361 = vsel %vm359, %v360, %v352
  %v362 = vsel %vm355, %v358, %v361
  %v363 = vsel %vm353, nan, %v362
  %v364 = vand.u32 2147483647, %v52
  %vm365 = vcmp.le.f32.partialorder %v364, 0.7853982
  %vm366 = vcmp.lt.s32.totalorder %v52, 0
  %v367 = vand.u32 %v52, 2139095040
  %v368 = vshrl.u32 %v367, 23
  %v369 = vsub.s32 %v368, 127
  %v370 = vand.u32 2147483647, %v52
  %v371 = vand.u32 %v370, 8388607
  %v372 = vor.u32 %v371, 8388608
  %v373 = vsub.s32 0, %v372
  %v374 = vadd.s32 %v369, 1
  %vm375 = vcmp.gt.s32.totalorder %v374, 0
  %v376 = vsel %vm375, %v374, 0
  %v377 = vshrl.u32 %v376, 5
  %v378 = vand.u32 %v376, 31
  %v379 = vsub.s32 32, %v378
  %v380 = vshrl.u32 683565275, %v379
  %v381 = vshll.u32 683565275, %v378
  %v382 = vshrl.u32 2475754826, %v379
  %v383 = vor.u32 %v381, %v382
  %v384 = vshll.u32 2475754826, %v378
  %v385 = vshrl.u32 2131351028, %v379
  %v386 = vor.u32 %v384, %v385
  %v387 = vshll.u32 2131351028, %v378
  %v388 = vshrl.u32 2102212464, %v379
  %v389 = vor.u32 %v387, %v388
  %v390 = vshll.u32 2102212464, %v378
  %v391 = vshrl.u32 920167782, %v379
  %v392 = vor.u32 %v390, %v391
  %v393 = vshll.u32 920167782, %v378
  %v394 = vshrl.u32 1326507024, %v379
  %v395 = vor.u32 %v393, %v394
  %vm396 = vcmp.lt.s32.totalorder %v377, 1
  %vm397 = vcmp.lt.s32.totalorder %v377, 2
  %vm398 = vcmp.lt.s32.totalorder %v377, 3
  %vm399 = vcmp.lt.s32.totalorder %v377, 4
  %v400 = vsel %vm396, %v380, %v383
  %v401 = vsel %vm399, %v389, 2102212464
  %v402 = vsel %vm398, %v386, %v401
  %v403 = vsel %vm397, %v400, %v402
  %v404 = vsel %vm396, %v383, %v386
  %v405 = vsel %vm399, %v392, 920167782
  %v406 = vsel %vm398, %v389, %v405
  %v407 = vsel %vm397, %v404, %v406
  %v408 = vsel %vm396, %v386, %v389
  %v409 = vsel %vm399, %v395, 1326507024
  %v410 = vsel %vm398, %v392, %v409
  %v411 = vsel %vm397, %v408, %v410
  %v412 = vshll.u32 %v372, 8
  %v413 = vmul.u32.u64.compose %v412, %v411
  %v414 = vextract.low.u32 %v413
  %v415 = vextract.high.u32 %v413
  %v416 = vmul.u32.u64.compose %v412, %v407
  %v417 = vextract.low.u32 %v416
  %v418 = vextract.high.u32 %v416
  %v419 = vmul.u32 %v412, %v403
  %v420 = vadd.s32 %v415, %v417
  %vm421 = vc.u32 %v415, %v417
  %v422 = vadd.s32 %v418, 1
  %v423 = vsel %vm421, %v422, %v418
  %v424 = vadd.s32 %v419, %v423
  %v425 = vadd.s32 %v424, 536870912
  %v426 = vshrl.u32 %v425, 30
  %v427 = vshll.u32 %v426, 30
  %v428 = vsub.s32 %v424, %v427
  %vm429 = vcmp.lt.s32.totalorder %v428, 0
  %v430 = vsub.s32 0, %v428
  %v431 = vsel %vm429, %v430, %v428
  %v432 = vclz %v431
  %v433 = vsub.s32 %v432, 2
  %vm434 = vcmp.gt.s32.totalorder 0, %v433
  %v435 = vsel %vm434, 0, %v433
  %v436 = vsub.s32 32, %v435
  %v437 = vshll.u32 %v428, %v435
  %v438 = vshrl.u32 %v420, %v436
  %v439 = vor.u32 %v437, %v438
  %v440 = vsub.s32 4294967266, %v435
  %v441 = vadd.s32 %v440, 127
  %v442 = vshll.u32 %v441, 23
  %v443 = vor.u32 4788187, %v442
  %v444 = vand.u32 2147483647, %v443
  %v446 = vcvt.s32.f32 %v439
  %v447 = vmul.f32 %v446, %v444
  %v448 = vxor.u32 %v447, 2147483648
  %v449 = vsel %vm366, %v448, %v447
  %v450 = vsub.s32 4, %v426
  %v451 = vsel %vm366, %v450, %v426
  %v452 = vsel %vm365, %v52, %v449
  %v453 = vsel %vm365, 0, %v451
  %v454 = vcosq.f32.pop %v452
  %v455 = vsinq.f32.pop %v452
  %vm456 = vweird.f32 %v52
  %v457 = vand.u32 %v453, 3
  %vm458 = vcmp.lt.s32.totalorder %v457, 2
  %vm459 = vcmp.eq.s32.totalorder %v457, 0
  %v460 = vxor.u32 %v455, 2147483648
  %v461 = vsel %vm459, %v454, %v460
  %vm462 = vcmp.eq.s32.totalorder %v457, 2
  %v463 = vxor.u32 %v454, 2147483648
  %v464 = vsel %vm462, %v463, %v455
  %v465 = vsel %vm458, %v461, %v464
  %v466 = vsel %vm456, nan, %v465
  %v467 = vadd.f32 %v363, %v363
  %v468 = vadd.f32 %v466, %v466
  %v469 = vmul.f32 %v467, %v156
  %v470 = vmul.f32 %v468, %v260
  %v471 = vmul.f32 %v156, -0.31830987
  %v472 = vmul.f32 %v260, -0.31830987
  %v473 = vmul.f32 %v469, 0.15915494
  %v474 = vmul.f32 %v470, 0.15915494
  %v475 = vadd.f32 %v471, %v473
  %v476 = vadd.f32 %v472, %v474
  %v477 = vmul.f32 %v467, %v469
  %v478 = vmul.f32 %v468, %v470
  %v479 = vsub.f32 %v477, %v156
  %v480 = vsub.f32 %v478, %v260
  %v481 = vmul.f32 %v479, -0.10610329
  %v482 = vmul.f32 %v480, -0.10610329
  %v483 = vadd.f32 %v475, %v481
  %v484 = vadd.f32 %v476, %v482
  %v485 = vmul.f32 %v467, %v479
  %v486 = vmul.f32 %v468, %v480
  %v487 = vsub.f32 %v485, %v469
  %v488 = vsub.f32 %v486, %v470
  %v489 = vmul.f32 %v487, 0.07957747
  %v490 = vmul.f32 %v488, 0.07957747
  %v491 = vadd.f32 %v483, %v489
  %v492 = vadd.f32 %v484, %v490
  %v493 = vmul.f32 %v467, %v487
  %v494 = vmul.f32 %v468, %v488
  %v495 = vsub.f32 %v493, %v479
  %v496 = vsub.f32 %v494, %v480
  %v497 = vmul.f32 %v495, -0.06366198
  %v498 = vmul.f32 %v496, -0.06366198
  %v499 = vadd.f32 %v491, %v497
  %v500 = vadd.f32 %v492, %v498
  %v501 = vmul.f32 %v467, %v495
  %v502 = vmul.f32 %v468, %v496
  %v503 = vsub.f32 %v501, %v487
  %v504 = vsub.f32 %v502, %v488
  %v505 = vmul.f32 %v503, 0.053051647
  %v506 = vmul.f32 %v504, 0.053051647
  %v507 = vadd.f32 %v499, %v505
  %v508 = vadd.f32 %v500, %v506
  %v509 = vmul.f32 %v467, %v503
  %v510 = vmul.f32 %v468, %v504
  %v511 = vsub.f32 %v509, %v495
  %v512 = vsub.f32 %v510, %v496
  %v513 = vmul.f32 %v511, -0.04547284
  %v514 = vmul.f32 %v512, -0.04547284
  %v515 = vadd.f32 %v507, %v513
  %v516 = vadd.f32 %v508, %v514
  %v517 = vmul.f32 %v467, %v511
  %v518 = vmul.f32 %v468, %v512
  %v519 = vsub.f32 %v517, %v503
  %v520 = vsub.f32 %v518, %v504
  %v521 = vmul.f32 %v519, 0.039788734
  %v522 = vmul.f32 %v520, 0.039788734
  %v523 = vadd.f32 %v515, %v521
  %v524 = vadd.f32 %v516, %v522
  %v525 = vmul.f32 %v467, %v519
  %v526 = vmul.f32 %v468, %v520
  %v527 = vsub.f32 %v525, %v511
  %v528 = vsub.f32 %v526, %v512
  %v529 = vmul.f32 %v527, -0.035367765
  %v530 = vmul.f32 %v528, -0.035367765
  %v531 = vadd.f32 %v523, %v529
  %v532 = vadd.f32 %v524, %v530
  %v533 = vmul.f32 %v467, %v527
  %v534 = vmul.f32 %v468, %v528
  %v535 = vsub.f32 %v533, %v519
  %v536 = vsub.f32 %v534, %v520
  %v537 = vmul.f32 %v535, 0.03183099
  %v538 = vmul.f32 %v536, 0.03183099
  %v539 = vadd.f32 %v531, %v537
  %v540 = vadd.f32 %v532, %v538
  %v541 = vadd.f32 %v45, %v539
  %v542 = vadd.f32 %v46, %v540
  %v543 = vmin.f32 %v541, %v542
  %544 = vmin.xlane.f32.xlu0 %v543
  %v545 = vpop.xlane.xlu0 %544
  %v546 = vrot.slane %v545, 4
  %v547 = vmin.f32 %v545, %v546
  %v548 = vrot.slane %v547, 2
  %v549 = vmin.f32 %v547, %v548
  %v550 = vrot.slane %v549, 1
  %v551 = vmin.f32 %v549, %v550
  %s552 = vtos %v551
  %v553 = vmax.f32 %v541, %v542
  %554 = vmax.xlane.f32.xlu0 %v553
  %v555 = vpop.xlane.xlu0 %554
  %v556 = vrot.slane %v555, 4
  %v557 = vmax.f32 %v555, %v556
  %v558 = vrot.slane %v557, 2
  %v559 = vmax.f32 %v557, %v558
  %v560 = vrot.slane %v559, 1
  %v561 = vmax.f32 %v559, %v560
  %s562 = vtos %v561
  %s563 = ssub.f32 %s562, %s552
  %p564 = scmp.gt.f32.partialorder %s563, 0.0
  %s565 = scalar_select %p564, %s563, 1.0
  %v566 = vstv %s565
  %v567 = vrcp.pop %v566
  %s568 = vtos %v567
  %s569 = smul.f32 %s30, %s568
  %v570 = vstv %s552
  %v571 = vsub.f32 %v541, %v570
  %v572 = vsub.f32 %v542, %v570
  %v573 = vstv %s569
  %v574 = vmul.f32 %v571, %v573
  %v575 = vmul.f32 %v572, %v573
  %v576 = vadd.f32 %v574, %v33
  %v577 = vadd.f32 %v575, %v33
  %578 = vst [vmem:[%s1] sm:$0xff] %v576
  %579 = vst [vmem:[%s1 + $0x8] sm:$0xff] %v577
  // Predicated region
  $region6: #{_quantize_impl.1} parent=0 // pred_check
    _
  $region7: #{_quantize_impl.1} parent=0 // pred_check_branch
    %581 = sbr.rel (0) target = $region9
  $region8: #{_quantize_impl.1} parent=0 // pred_region
    _
  $region9: #{_quantize_impl.1} parent=0 // pred_fallthru
    _
  // Predicated region
  $region10: #{_quantize_impl.1} parent=0 // pred_check
    _
  $region11: #{_quantize_impl.1} parent=0 // pred_check_branch
    %583 = sbr.rel (0) target = $region13
  $region12: #{_quantize_impl.1} parent=0 // pred_region
    _
  $region13: #{_quantize_impl.1} parent=0 // pred_fallthru
    _

</llo_original>
